<compile_context>
chip_gen: v6e
topology: v6e:2x2x1
jax: 0.10.0
libtpu: 0.0.40
codegen_flags: <defaults>
</compile_context>

<pallas_src>
import numpy as np
import jax
import jax.numpy as jnp
from jax.experimental import pallas as pl
from jax.experimental.pallas import tpu as pltpu


def _position_weights(j: int, grad_len: int) -> np.ndarray:
    """torch.linspace(0, 1, grad_len)-based position weights for level j."""
    pos = np.linspace(0.0, 1.0, grad_len, dtype=np.float64)
    if j == 0:
        return 1.0 + 4.0 * pos ** 2
    elif j == 1:
        return 5.0 - 4.0 * pos
    elif j == 2:
        return 6.0 - 5.0 * np.sqrt(pos)
    return np.ones_like(pos)


def _build_weight_slab(level_shapes, lane_len: int) -> np.ndarray:
    """Constant C such that loss == sum((|dp| - |dt|)**2 * C) over the packed slab.

    Folds w_j(pos)^2, the level weight 2/(j+1), the per-level mean divisor
    1/(B_j*(L_j-1)) and the padding/wrap validity mask into one array.
    """
    rows = sum(b for b, _ in level_shapes)
    c = np.zeros((rows, lane_len), dtype=np.float32)
    r = 0
    for j, (b, l) in enumerate(level_shapes):
        grad_len = l - 1
        if grad_len > 0:
            w = _position_weights(j, grad_len)
            level_weight = 2.0 / (j + 1)
            row = (w * w) * (level_weight / (b * grad_len))
            c[r:r + b, :grad_len] = row[None, :].astype(np.float32)
        # grad_len == 0 (L_j == 1) is degenerate (torch mean of empty -> NaN);
        # here the level simply contributes 0.
        r += b
    return c


def _fused_kernel(pred_ref, target_ref, c_ref, out_ref):
    p = pred_ref[...].astype(jnp.float32)
    t = target_ref[...].astype(jnp.float32)
    lane = p.shape[-1]
    # Forward difference along the lane axis via an XLU rotate:
    # roll(x, lane-1) is a circular left shift by one, i.e. rolled[:, i] = x[:, i+1]
    # for i < lane-1.  The wrap column and the zero padding are masked out by
    # zeros in c_ref, so no explicit lane mask is needed.
    pg = jnp.abs(pltpu.roll(p, lane - 1, 1) - p)
    tg = jnp.abs(pltpu.roll(t, lane - 1, 1) - t)
    d = pg - tg
    # (pg*w - tg*w)^2 == (pg - tg)^2 * w^2 ; w^2, the 2/(j+1) level weight and
    # the per-level mean divisor are pre-folded into c_ref (trace-time constant).
    out_ref[0] = jnp.sum(d * d * c_ref[...])


def spectral_gradient_loss(pred_coeffs, target_coeffs, levels: int = 3) -> jax.Array:
    """JAX/Pallas equivalent of SpectralGradientLoss.forward.

    pred_coeffs / target_coeffs: dicts with key 'd' -> list of (B, L_j) arrays.
    """
    n_levels = min(levels, len(pred_coeffs["d"]))
    if n_levels == 0:
        return jnp.float32(0.0)

    pred_d = [pred_coeffs["d"][j] for j in range(n_levels)]
    target_d = [target_coeffs["d"][j] for j in range(n_levels)]
    level_shapes = [tuple(a.shape) for a in pred_d]

    max_len = max(l for _, l in level_shapes)
    lane_len = max(128, ((max_len + 127) // 128) * 128)  # lane-dense, multiple of 128

    def pack(arrs):
        padded = [jnp.pad(a, ((0, 0), (0, lane_len - a.shape[1]))) for a in arrs]
        return jnp.concatenate(padded, axis=0)

    pred_slab = pack(pred_d)      # (sum_j B_j, lane_len)
    target_slab = pack(target_d)  # (sum_j B_j, lane_len)
    c_slab = jnp.asarray(_build_weight_slab(level_shapes, lane_len))

    rows = pred_slab.shape[0]
    out = pl.pallas_call(
        _fused_kernel,
        out_shape=jax.ShapeDtypeStruct((1,), jnp.float32),
        in_specs=[
            pl.BlockSpec((rows, lane_len), lambda: (0, 0)),  # full-array blocks in VMEM
            pl.BlockSpec((rows, lane_len), lambda: (0, 0)),
            pl.BlockSpec((rows, lane_len), lambda: (0, 0)),
        ],
        out_specs=pl.BlockSpec(memory_space=pltpu.SMEM),
    )(pred_slab, target_slab, c_slab)
    return out[0]


def _reference_loss(pred_coeffs, target_coeffs, levels: int = 3) -> jax.Array:
    """Pure-JAX reference for validation (mirrors the PyTorch module)."""
    loss = jnp.float32(0.0)
    for j in range(min(levels, len(pred_coeffs["d"]))):
        level_weight = 2.0 / (j + 1)
        p = pred_coeffs["d"][j].astype(jnp.float32)
        t = target_coeffs["d"][j].astype(jnp.float32)
        pg = jnp.abs(jnp.diff(p, axis=1))
        tg = jnp.abs(jnp.diff(t, axis=1))
        grad_len = pg.shape[1]
        pos = jnp.linspace(0.0, 1.0, grad_len).reshape(1, -1)
        if j == 0:
            w = 1.0 + 4.0 * pos ** 2
        elif j == 1:
            w = 5.0 - 4.0 * pos
        elif j == 2:
            w = 6.0 - 5.0 * jnp.sqrt(pos)
        else:
            w = jnp.ones_like(pos)
        loss = loss + level_weight * jnp.mean((pg * w - tg * w) ** 2)
    return loss


if __name__ == "__main__":
    key = jax.random.PRNGKey(0)
    batch = 2
    # three wavelet detail levels of decreasing length (coarser -> shorter)
    level_lens = [64, 32, 16]

    keys = jax.random.split(key, 2 * len(level_lens))
    pred_d = [
        jax.random.normal(keys[2 * i], (batch, L), dtype=jnp.float32)
        for i, L in enumerate(level_lens)
    ]
    target_d = [
        jax.random.normal(keys[2 * i + 1], (batch, L), dtype=jnp.float32)
        for i, L in enumerate(level_lens)
    ]
    pred_coeffs = {"d": pred_d}
    target_coeffs = {"d": target_d}

    loss = jax.block_until_ready(
        spectral_gradient_loss(pred_coeffs, target_coeffs, levels=3)
    )
    ref = jax.block_until_ready(
        _reference_loss(pred_coeffs, target_coeffs, levels=3)
    )
    assert jnp.allclose(loss, ref, rtol=1e-4, atol=1e-6), (loss, ref)

    print("KERNEL_OK")
</pallas_src>

<mosaic_0001>
module attributes {stable_mosaic.version = 11 : i64} {
  func.func @_fused_kernel(%arg0: memref<6x128xf32, #tpu.memory_space<vmem>>, %arg1: memref<6x128xf32, #tpu.memory_space<vmem>>, %arg2: memref<6x128xf32, #tpu.memory_space<vmem>>, %arg3: memref<1xf32, #tpu.memory_space<smem>>) attributes {dimension_semantics = [], scalar_prefetch = 0 : i64, scratch_operands = 0 : i64, tpu.core_type = #tpu.core_type<tc>} {
    %c0 = arith.constant 0 : index
    %c0_0 = arith.constant 0 : index
    %0 = vector.load %arg0[%c0, %c0_0] : memref<6x128xf32, #tpu.memory_space<vmem>>, vector<6x128xf32>
    %c0_1 = arith.constant 0 : index
    %c0_2 = arith.constant 0 : index
    %1 = vector.load %arg1[%c0_1, %c0_2] : memref<6x128xf32, #tpu.memory_space<vmem>>, vector<6x128xf32>
    %c127_i32 = arith.constant 127 : i32
    %2 = tpu.dynamic_rotate %0 by %c127_i32 dim 1 : vector<6x128xf32>, i32 -> vector<6x128xf32>
    %3 = arith.subf %2, %0 : vector<6x128xf32>
    %4 = math.absf %3 : vector<6x128xf32>
    %c127_i32_3 = arith.constant 127 : i32
    %5 = tpu.dynamic_rotate %1 by %c127_i32_3 dim 1 : vector<6x128xf32>, i32 -> vector<6x128xf32>
    %6 = arith.subf %5, %1 : vector<6x128xf32>
    %7 = math.absf %6 : vector<6x128xf32>
    %8 = arith.subf %4, %7 : vector<6x128xf32>
    %9 = arith.mulf %8, %8 : vector<6x128xf32>
    %c0_4 = arith.constant 0 : index
    %c0_5 = arith.constant 0 : index
    %10 = vector.load %arg2[%c0_4, %c0_5] : memref<6x128xf32, #tpu.memory_space<vmem>>, vector<6x128xf32>
    %11 = arith.mulf %9, %10 : vector<6x128xf32>
    %12 = vector.shape_cast %11 : vector<6x128xf32> to vector<1x6x128xf32>
    %cst = arith.constant dense<0.000000e+00> : vector<1xf32>
    %13 = vector.multi_reduction <add>, %12, %cst [1, 2] : vector<1x6x128xf32> to vector<1xf32>
    %14 = vector.shape_cast %13 : vector<1xf32> to vector<1x1x1xf32>
    %15 = vector.extract %14[0, 0, 0] : f32 from vector<1x1x1xf32>
    %c0_6 = arith.constant 0 : index
    %16 = memref.load %arg3[%c0_6] : memref<1xf32, #tpu.memory_space<smem>>
    memref.store %15, %arg3[%c0_6] : memref<1xf32, #tpu.memory_space<smem>>
    return
  }
}

</mosaic_0001>

<llo_original>
// kernel: tpu_custom_call.1
$region0: #{tpu_custom_call.1}
  #allocation0 [shape = 'u32[]', space=smem, size = 0x4, offset = 0x4, fixed_abs, tag = 'smem constant byte address 0x4 - core index']
  #allocation1 [shape = 'u32[144,128]{1,0:T(1,128)}', space=vmem, size = 0x12000, scoped, tag = 'internal scratch']
  %s0 = inlined_call_operand.hbm [shape: f32[6,128], index: 0, kind: input, shape index: {}]
  %s1 = inlined_call_operand.hbm [shape: f32[6,128], index: 1, kind: input, shape index: {}]
  %s2 = inlined_call_operand.hbm [shape: f32[6,128], index: 2, kind: input, shape index: {}]
  %s3 = inlined_call_operand.hbm [shape: f32[1], index: 3, kind: output, shape index: {}]
  %s4 = sld [smem:[#allocation0]]
  $region34: #{tpu_custom_call.1} parent=0
    _
  %s6 = ssub.s32 1, %s4
  %s7 = scalar_select 0, %s6, %s4
  $region1: #{tpu_custom_call.1} parent=0
    #allocation2 [shape = 'u8[4096]{0}', space=vmem, size = 0x1000, scoped, tag = 'input window, operand 0, single buffered']
    #allocation3 [shape = 's32[1]{0}', space=sflag, size = 0x4, scoped, tag = 'scoped memory for tpu_custom_call.1']
    #allocation4 [shape = 's32[1]{0}', space=sflag, size = 0x4, scoped, tag = 'scoped memory for tpu_custom_call.1']
    #allocation5 [shape = 'u8[4096]{0}', space=vmem, size = 0x1000, scoped, tag = 'input window, operand 1, single buffered']
    #allocation6 [shape = 's32[1]{0}', space=sflag, size = 0x4, scoped, tag = 'scoped memory for tpu_custom_call.1']
    #allocation7 [shape = 'u8[4096]{0}', space=vmem, size = 0x1000, scoped, tag = 'input window, operand 2, single buffered']
    #allocation8 [shape = 'u8[512]{0}', space=smem, size = 0x200, scoped, tag = 'output window, operand 0, single buffered']
    %8 = vsyncpa [#allocation3], 0
    %9 = vsyncpa [#allocation6], 0
    %10 = vsyncpa [#allocation4], 0
    // Predicated region
    $region2: #{tpu_custom_call.1} parent=1 // pred_check
      _
    $region3: #{tpu_custom_call.1} parent=1 // pred_check_branch
      %12 = sbr.rel (0) target = $region5
    $region4: #{tpu_custom_call.1} parent=1 // pred_region
      %s14 = ssub.s32 128, 128
      %15 = vsyncadd [#allocation3], %s14
      %s17 = sshll.u32 [#allocation2], 4
      %s18 = int_to_ptr.vmem [resolvable:$true] %s17
      %20 = dma.hbm_to_vmem [thread:$0]  %s0, 128, %s18, [#allocation3]
    $region5: #{tpu_custom_call.1} parent=1 // pred_fallthru
      _
    // Predicated region
    $region6: #{tpu_custom_call.1} parent=1 // pred_check
      _
    $region7: #{tpu_custom_call.1} parent=1 // pred_check_branch
      %22 = sbr.rel (0) target = $region9
    $region8: #{tpu_custom_call.1} parent=1 // pred_region
      %s24 = ssub.s32 128, 128
      %25 = vsyncadd [#allocation6], %s24
      %s27 = sshll.u32 [#allocation5], 4
      %s28 = int_to_ptr.vmem [resolvable:$true] %s27
      %30 = dma.hbm_to_vmem [thread:$0]  %s1, 128, %s28, [#allocation6]
    $region9: #{tpu_custom_call.1} parent=1 // pred_fallthru
      _
    // Predicated region
    $region10: #{tpu_custom_call.1} parent=1 // pred_check
      _
    $region11: #{tpu_custom_call.1} parent=1 // pred_check_branch
      %32 = sbr.rel (0) target = $region13
    $region12: #{tpu_custom_call.1} parent=1 // pred_region
      %s34 = ssub.s32 128, 128
      %35 = vsyncadd [#allocation6], %s34
      %s37 = sshll.u32 [#allocation7], 4
      %s38 = int_to_ptr.vmem [resolvable:$true] %s37
      %40 = dma.hbm_to_vmem [thread:$0]  %s2, 128, %s38, [#allocation6]
    $region13: #{tpu_custom_call.1} parent=1 // pred_fallthru
      _
    // Predicated region
    $region14: #{tpu_custom_call.1} parent=1 // pred_check
      _
    $region15: #{tpu_custom_call.1} parent=1 // pred_check_branch
      %42 = sbr.rel (0) target = $region17
    $region16: #{tpu_custom_call.1} parent=1 // pred_region
      %43 = dma.done [#allocation3], 128
    $region17: #{tpu_custom_call.1} parent=1 // pred_fallthru
      _
    // Predicated region
    $region18: #{tpu_custom_call.1} parent=1 // pred_check
      _
    $region19: #{tpu_custom_call.1} parent=1 // pred_check_branch
      %45 = sbr.rel (0) target = $region21
    $region20: #{tpu_custom_call.1} parent=1 // pred_region
      %46 = dma.done [#allocation6], 128
    $region21: #{tpu_custom_call.1} parent=1 // pred_fallthru
      _
    // Predicated region
    $region22: #{tpu_custom_call.1} parent=1 // pred_check
      _
    $region23: #{tpu_custom_call.1} parent=1 // pred_check_branch
      %48 = sbr.rel (0) target = $region25
    $region24: #{tpu_custom_call.1} parent=1 // pred_region
      %49 = dma.done [#allocation6], 128
    $region25: #{tpu_custom_call.1} parent=1 // pred_fallthru
      _
    %v50 = vld [vmem:[#allocation2] sm:$0x3f]
    %v51 = vld [vmem:[#allocation5] sm:$0x3f]
    %52 = vrot.lane.b32.xlu0 %v50, 127
    %v53 = vpop.permute.xlu0 %52
    %v54 = vsub.f32 %v53, %v50
    %v55 = vand.u32 2147483647, %v54
    %56 = vrot.lane.b32.xlu0 %v51, 127
    %v57 = vpop.permute.xlu0 %56
    %v58 = vsub.f32 %v57, %v51
    %v59 = vand.u32 2147483647, %v58
    %v60 = vsub.f32 %v55, %v59
    %v61 = vmul.f32 %v60, %v60
    %v62 = vld [vmem:[#allocation7] sm:$0x3f]
    %v63 = vmul.f32 %v61, %v62
    %vm64 = vcmask 1045504
    %v65 = vsel %vm64, %v63, 0.0
    %66 = vadd.xlane.f32.xlu0 %v65
    %v67 = vpop.xlane.xlu0 %66
    %v68 = vrot.slane %v67, 4
    %v69 = vadd.f32 %v67, %v68
    %v70 = vrot.slane %v69, 2
    %v71 = vadd.f32 %v69, %v70
    %v72 = vrot.slane %v71, 1
    %v73 = vadd.f32 %v71, %v72
    %s74 = vtos %v73
    %s75 = scalar_lea.smem [#allocation8], 0
    %76 = sst [smem:[%s75]] %s74
    // Predicated region
    $region26: #{tpu_custom_call.1} parent=1 // pred_check
      _
    $region27: #{tpu_custom_call.1} parent=1 // pred_check_branch
      %78 = sbr.rel (0) target = $region29
    $region28: #{tpu_custom_call.1} parent=1 // pred_region
      %s80 = ssub.s32 16, 16
      %81 = vsyncadd [#allocation4], %s80
      %84 = dma.smem_to_hbm [#allocation8], 16, %s3, [#allocation4]
    $region29: #{tpu_custom_call.1} parent=1 // pred_fallthru
      _
    // Predicated region
    $region30: #{tpu_custom_call.1} parent=1 // pred_check
      _
    $region31: #{tpu_custom_call.1} parent=1 // pred_check_branch
      %86 = sbr.rel (0) target = $region33
    $region32: #{tpu_custom_call.1} parent=1 // pred_region
      %87 = dma.done [#allocation4], 16
    $region33: #{tpu_custom_call.1} parent=1 // pred_fallthru
      _
    %88 = sfence
    %89 = vsyncpa [#allocation3], 1
    %90 = vsyncpa [#allocation6], 1
    %91 = vsyncpa [#allocation4], 1

</llo_original>
